<compile_context>
chip_gen: v7x
topology: tpu7x:2x2x1
jax: 0.10.0
libtpu: 0.0.40
codegen_flags: <defaults>
</compile_context>

<pallas_src>
import jax
import jax.numpy as jnp
from jax.experimental import pallas as pl
from jax.experimental.pallas import tpu as pltpu

KH, KW = 3, 3
CIN, COUT = 3, 6


def conv2d_plane_kernel(x_ref, w_ref, b_ref, o_ref):
    # x_ref: (CIN, H, W)      VMEM, f32
    # w_ref: (COUT*CIN*KH*KW,) SMEM, f32 (flattened OIHW weights)
    # b_ref: (COUT,)           SMEM, f32
    # o_ref: (Hout, Wout)      VMEM — one output-channel plane, lane axis = Wout
    cout = pl.program_id(1)
    Hout, Wout = o_ref.shape

    base = cout * (CIN * KH * KW)
    # Bias folded into accumulator init (no separate epilogue add).
    acc = jnp.full((Hout, Wout), b_ref[cout], dtype=jnp.float32)

    # 27 statically-unrolled scalar-broadcast FMAs on lane-dense planes (VPU).
    for cin in range(CIN):
        for kh in range(KH):
            for kw in range(KW):
                w_s = w_ref[base + cin * KH * KW + kh * KW + kw]
                acc = acc + w_s * x_ref[cin, kh:kh + Hout, kw:kw + Wout]

    o_ref[...] = acc.astype(o_ref.dtype)


def shuanghe_forward(x_nchw, w_oihw, b):
    """Conv2d(3, 6, k=3, stride=1, padding=0) — matches PyTorch semantics (NCHW)."""
    N, C, H, W = x_nchw.shape
    assert C == CIN
    Hout, Wout = H - KH + 1, W - KW + 1

    w_flat = w_oihw.reshape(COUT * CIN * KH * KW).astype(jnp.float32)
    b_f = b.astype(jnp.float32)

    itemsize = jnp.dtype(x_nchw.dtype).itemsize
    flops = 2 * N * Hout * Wout * COUT * CIN * KH * KW
    bytes_accessed = (N * CIN * H * W * itemsize
                      + N * COUT * Hout * Wout * itemsize
                      + w_flat.size * 4 + b_f.size * 4)

    out = pl.pallas_call(
        conv2d_plane_kernel,
        out_shape=jax.ShapeDtypeStruct((N, COUT, Hout, Wout), x_nchw.dtype),
        grid=(N, COUT),
        in_specs=[
            # Whole (CIN, H, W) image per batch; block index is constant along
            # the COUT grid axis so it is fetched once per batch element.
            pl.BlockSpec((None, CIN, H, W), lambda n, c: (n, 0, 0, 0)),
            # Flattened weights / bias live in SMEM (1-D to avoid (8,128) padding).
            pl.BlockSpec(memory_space=pltpu.MemorySpace.SMEM),
            pl.BlockSpec(memory_space=pltpu.MemorySpace.SMEM),
        ],
        out_specs=pl.BlockSpec((None, None, Hout, Wout), lambda n, c: (n, c, 0, 0)),
        compiler_params=pltpu.CompilerParams(
            dimension_semantics=("parallel", "parallel")),
        cost_estimate=pl.CostEstimate(
            flops=flops, transcendentals=0, bytes_accessed=bytes_accessed),
    )(x_nchw, w_flat, b_f)

    return out


if __name__ == "__main__":
    key = jax.random.PRNGKey(0)
    kx, kw, kb = jax.random.split(key, 3)

    # Deterministic synthetic parameters (PyTorch-style fan_in uniform bound).
    fan_in = CIN * KH * KW
    bound = 1.0 / (fan_in ** 0.5)
    w = jax.random.uniform(kw, (COUT, CIN, KH, KW), jnp.float32, -bound, bound)
    b = jax.random.uniform(kb, (COUT,), jnp.float32, -bound, bound)

    x = jax.random.normal(kx, (2, CIN, 16, 16), jnp.float32)

    out = jax.block_until_ready(shuanghe_forward(x, w, b))
    assert out.shape == (2, COUT, 14, 14), out.shape

    # Reference check against XLA's conv (NCHW, OIHW, VALID padding).
    ref = jax.lax.conv_general_dilated(
        x, w, window_strides=(1, 1), padding="VALID",
        dimension_numbers=("NCHW", "OIHW", "NCHW"),
    ) + b.reshape(1, COUT, 1, 1)
    assert jnp.allclose(out, ref, atol=1e-5, rtol=1e-5)

    print("KERNEL_OK")
</pallas_src>

<mosaic_0001>
module attributes {stable_mosaic.version = 11 : i64} {
  func.func @conv2d_plane_kernel(%arg0: i32, %arg1: i32, %arg2: memref<1x3x16x16xf32, #tpu.memory_space<vmem>>, %arg3: memref<162xf32, #tpu.memory_space<smem>>, %arg4: memref<6xf32, #tpu.memory_space<smem>>, %arg5: memref<1x1x14x14xf32, #tpu.memory_space<vmem>>) attributes {dimension_semantics = [#tpu.dimension_semantics<parallel>, #tpu.dimension_semantics<parallel>], iteration_bounds = array<i64: 2, 6>, scalar_prefetch = 0 : i64, scratch_operands = 0 : i64, tpu.core_type = #tpu.core_type<tc>, window_params = [{transform_indices = @transform_0, window_bounds = array<i64: 1, 3, 16, 16>}, {transform_indices = @transform_1, window_bounds = array<i64: 162>}, {transform_indices = @transform_2, window_bounds = array<i64: 6>}, {transform_indices = @transform_3, window_bounds = array<i64: 1, 1, 14, 14>}]} {
    %c27_i32 = arith.constant 27 : i32
    %0 = arith.muli %arg1, %c27_i32 : i32
    %1 = arith.index_cast %arg1 : i32 to index
    %2 = memref.load %arg4[%1] : memref<6xf32, #tpu.memory_space<smem>>
    %3 = vector.broadcast %2 : f32 to vector<14x14xf32>
    %c0_i32 = arith.constant 0 : i32
    %4 = arith.addi %0, %c0_i32 : i32
    %c0_i32_0 = arith.constant 0 : i32
    %5 = arith.addi %4, %c0_i32_0 : i32
    %c0_i32_1 = arith.constant 0 : i32
    %6 = arith.addi %5, %c0_i32_1 : i32
    %7 = arith.index_cast %6 : i32 to index
    %8 = memref.load %arg3[%7] : memref<162xf32, #tpu.memory_space<smem>>
    %c0 = arith.constant 0 : index
    %c0_2 = arith.constant 0 : index
    %c0_3 = arith.constant 0 : index
    %c0_4 = arith.constant 0 : index
    %9 = vector.load %arg2[%c0, %c0_2, %c0_3, %c0_4] : memref<1x3x16x16xf32, #tpu.memory_space<vmem>>, vector<1x1x14x14xf32>
    %10 = vector.shape_cast %9 : vector<1x1x14x14xf32> to vector<14x14xf32>
    %11 = vector.broadcast %8 : f32 to vector<14x14xf32>
    %12 = arith.mulf %11, %10 : vector<14x14xf32>
    %13 = arith.addf %3, %12 : vector<14x14xf32>
    %c0_i32_5 = arith.constant 0 : i32
    %14 = arith.addi %0, %c0_i32_5 : i32
    %c0_i32_6 = arith.constant 0 : i32
    %15 = arith.addi %14, %c0_i32_6 : i32
    %c1_i32 = arith.constant 1 : i32
    %16 = arith.addi %15, %c1_i32 : i32
    %17 = arith.index_cast %16 : i32 to index
    %18 = memref.load %arg3[%17] : memref<162xf32, #tpu.memory_space<smem>>
    %c0_7 = arith.constant 0 : index
    %c0_8 = arith.constant 0 : index
    %c0_9 = arith.constant 0 : index
    %c1 = arith.constant 1 : index
    %19 = vector.load %arg2[%c0_7, %c0_8, %c0_9, %c1] : memref<1x3x16x16xf32, #tpu.memory_space<vmem>>, vector<1x1x14x14xf32>
    %20 = vector.shape_cast %19 : vector<1x1x14x14xf32> to vector<14x14xf32>
    %21 = vector.broadcast %18 : f32 to vector<14x14xf32>
    %22 = arith.mulf %21, %20 : vector<14x14xf32>
    %23 = arith.addf %13, %22 : vector<14x14xf32>
    %c0_i32_10 = arith.constant 0 : i32
    %24 = arith.addi %0, %c0_i32_10 : i32
    %c0_i32_11 = arith.constant 0 : i32
    %25 = arith.addi %24, %c0_i32_11 : i32
    %c2_i32 = arith.constant 2 : i32
    %26 = arith.addi %25, %c2_i32 : i32
    %27 = arith.index_cast %26 : i32 to index
    %28 = memref.load %arg3[%27] : memref<162xf32, #tpu.memory_space<smem>>
    %c0_12 = arith.constant 0 : index
    %c0_13 = arith.constant 0 : index
    %c0_14 = arith.constant 0 : index
    %c2 = arith.constant 2 : index
    %29 = vector.load %arg2[%c0_12, %c0_13, %c0_14, %c2] : memref<1x3x16x16xf32, #tpu.memory_space<vmem>>, vector<1x1x14x14xf32>
    %30 = vector.shape_cast %29 : vector<1x1x14x14xf32> to vector<14x14xf32>
    %31 = vector.broadcast %28 : f32 to vector<14x14xf32>
    %32 = arith.mulf %31, %30 : vector<14x14xf32>
    %33 = arith.addf %23, %32 : vector<14x14xf32>
    %c0_i32_15 = arith.constant 0 : i32
    %34 = arith.addi %0, %c0_i32_15 : i32
    %c3_i32 = arith.constant 3 : i32
    %35 = arith.addi %34, %c3_i32 : i32
    %c0_i32_16 = arith.constant 0 : i32
    %36 = arith.addi %35, %c0_i32_16 : i32
    %37 = arith.index_cast %36 : i32 to index
    %38 = memref.load %arg3[%37] : memref<162xf32, #tpu.memory_space<smem>>
    %c0_17 = arith.constant 0 : index
    %c0_18 = arith.constant 0 : index
    %c1_19 = arith.constant 1 : index
    %c0_20 = arith.constant 0 : index
    %39 = vector.load %arg2[%c0_17, %c0_18, %c1_19, %c0_20] : memref<1x3x16x16xf32, #tpu.memory_space<vmem>>, vector<1x1x14x14xf32>
    %40 = vector.shape_cast %39 : vector<1x1x14x14xf32> to vector<14x14xf32>
    %41 = vector.broadcast %38 : f32 to vector<14x14xf32>
    %42 = arith.mulf %41, %40 : vector<14x14xf32>
    %43 = arith.addf %33, %42 : vector<14x14xf32>
    %c0_i32_21 = arith.constant 0 : i32
    %44 = arith.addi %0, %c0_i32_21 : i32
    %c3_i32_22 = arith.constant 3 : i32
    %45 = arith.addi %44, %c3_i32_22 : i32
    %c1_i32_23 = arith.constant 1 : i32
    %46 = arith.addi %45, %c1_i32_23 : i32
    %47 = arith.index_cast %46 : i32 to index
    %48 = memref.load %arg3[%47] : memref<162xf32, #tpu.memory_space<smem>>
    %c0_24 = arith.constant 0 : index
    %c0_25 = arith.constant 0 : index
    %c1_26 = arith.constant 1 : index
    %c1_27 = arith.constant 1 : index
    %49 = vector.load %arg2[%c0_24, %c0_25, %c1_26, %c1_27] : memref<1x3x16x16xf32, #tpu.memory_space<vmem>>, vector<1x1x14x14xf32>
    %50 = vector.shape_cast %49 : vector<1x1x14x14xf32> to vector<14x14xf32>
    %51 = vector.broadcast %48 : f32 to vector<14x14xf32>
    %52 = arith.mulf %51, %50 : vector<14x14xf32>
    %53 = arith.addf %43, %52 : vector<14x14xf32>
    %c0_i32_28 = arith.constant 0 : i32
    %54 = arith.addi %0, %c0_i32_28 : i32
    %c3_i32_29 = arith.constant 3 : i32
    %55 = arith.addi %54, %c3_i32_29 : i32
    %c2_i32_30 = arith.constant 2 : i32
    %56 = arith.addi %55, %c2_i32_30 : i32
    %57 = arith.index_cast %56 : i32 to index
    %58 = memref.load %arg3[%57] : memref<162xf32, #tpu.memory_space<smem>>
    %c0_31 = arith.constant 0 : index
    %c0_32 = arith.constant 0 : index
    %c1_33 = arith.constant 1 : index
    %c2_34 = arith.constant 2 : index
    %59 = vector.load %arg2[%c0_31, %c0_32, %c1_33, %c2_34] : memref<1x3x16x16xf32, #tpu.memory_space<vmem>>, vector<1x1x14x14xf32>
    %60 = vector.shape_cast %59 : vector<1x1x14x14xf32> to vector<14x14xf32>
    %61 = vector.broadcast %58 : f32 to vector<14x14xf32>
    %62 = arith.mulf %61, %60 : vector<14x14xf32>
    %63 = arith.addf %53, %62 : vector<14x14xf32>
    %c0_i32_35 = arith.constant 0 : i32
    %64 = arith.addi %0, %c0_i32_35 : i32
    %c6_i32 = arith.constant 6 : i32
    %65 = arith.addi %64, %c6_i32 : i32
    %c0_i32_36 = arith.constant 0 : i32
    %66 = arith.addi %65, %c0_i32_36 : i32
    %67 = arith.index_cast %66 : i32 to index
    %68 = memref.load %arg3[%67] : memref<162xf32, #tpu.memory_space<smem>>
    %c0_37 = arith.constant 0 : index
    %c0_38 = arith.constant 0 : index
    %c2_39 = arith.constant 2 : index
    %c0_40 = arith.constant 0 : index
    %69 = vector.load %arg2[%c0_37, %c0_38, %c2_39, %c0_40] : memref<1x3x16x16xf32, #tpu.memory_space<vmem>>, vector<1x1x14x14xf32>
    %70 = vector.shape_cast %69 : vector<1x1x14x14xf32> to vector<14x14xf32>
    %71 = vector.broadcast %68 : f32 to vector<14x14xf32>
    %72 = arith.mulf %71, %70 : vector<14x14xf32>
    %73 = arith.addf %63, %72 : vector<14x14xf32>
    %c0_i32_41 = arith.constant 0 : i32
    %74 = arith.addi %0, %c0_i32_41 : i32
    %c6_i32_42 = arith.constant 6 : i32
    %75 = arith.addi %74, %c6_i32_42 : i32
    %c1_i32_43 = arith.constant 1 : i32
    %76 = arith.addi %75, %c1_i32_43 : i32
    %77 = arith.index_cast %76 : i32 to index
    %78 = memref.load %arg3[%77] : memref<162xf32, #tpu.memory_space<smem>>
    %c0_44 = arith.constant 0 : index
    %c0_45 = arith.constant 0 : index
    %c2_46 = arith.constant 2 : index
    %c1_47 = arith.constant 1 : index
    %79 = vector.load %arg2[%c0_44, %c0_45, %c2_46, %c1_47] : memref<1x3x16x16xf32, #tpu.memory_space<vmem>>, vector<1x1x14x14xf32>
    %80 = vector.shape_cast %79 : vector<1x1x14x14xf32> to vector<14x14xf32>
    %81 = vector.broadcast %78 : f32 to vector<14x14xf32>
    %82 = arith.mulf %81, %80 : vector<14x14xf32>
    %83 = arith.addf %73, %82 : vector<14x14xf32>
    %c0_i32_48 = arith.constant 0 : i32
    %84 = arith.addi %0, %c0_i32_48 : i32
    %c6_i32_49 = arith.constant 6 : i32
    %85 = arith.addi %84, %c6_i32_49 : i32
    %c2_i32_50 = arith.constant 2 : i32
    %86 = arith.addi %85, %c2_i32_50 : i32
    %87 = arith.index_cast %86 : i32 to index
    %88 = memref.load %arg3[%87] : memref<162xf32, #tpu.memory_space<smem>>
    %c0_51 = arith.constant 0 : index
    %c0_52 = arith.constant 0 : index
    %c2_53 = arith.constant 2 : index
    %c2_54 = arith.constant 2 : index
    %89 = vector.load %arg2[%c0_51, %c0_52, %c2_53, %c2_54] : memref<1x3x16x16xf32, #tpu.memory_space<vmem>>, vector<1x1x14x14xf32>
    %90 = vector.shape_cast %89 : vector<1x1x14x14xf32> to vector<14x14xf32>
    %91 = vector.broadcast %88 : f32 to vector<14x14xf32>
    %92 = arith.mulf %91, %90 : vector<14x14xf32>
    %93 = arith.addf %83, %92 : vector<14x14xf32>
    %c9_i32 = arith.constant 9 : i32
    %94 = arith.addi %0, %c9_i32 : i32
    %c0_i32_55 = arith.constant 0 : i32
    %95 = arith.addi %94, %c0_i32_55 : i32
    %c0_i32_56 = arith.constant 0 : i32
    %96 = arith.addi %95, %c0_i32_56 : i32
    %97 = arith.index_cast %96 : i32 to index
    %98 = memref.load %arg3[%97] : memref<162xf32, #tpu.memory_space<smem>>
    %c0_57 = arith.constant 0 : index
    %c1_58 = arith.constant 1 : index
    %c0_59 = arith.constant 0 : index
    %c0_60 = arith.constant 0 : index
    %99 = vector.load %arg2[%c0_57, %c1_58, %c0_59, %c0_60] : memref<1x3x16x16xf32, #tpu.memory_space<vmem>>, vector<1x1x14x14xf32>
    %100 = vector.shape_cast %99 : vector<1x1x14x14xf32> to vector<14x14xf32>
    %101 = vector.broadcast %98 : f32 to vector<14x14xf32>
    %102 = arith.mulf %101, %100 : vector<14x14xf32>
    %103 = arith.addf %93, %102 : vector<14x14xf32>
    %c9_i32_61 = arith.constant 9 : i32
    %104 = arith.addi %0, %c9_i32_61 : i32
    %c0_i32_62 = arith.constant 0 : i32
    %105 = arith.addi %104, %c0_i32_62 : i32
    %c1_i32_63 = arith.constant 1 : i32
    %106 = arith.addi %105, %c1_i32_63 : i32
    %107 = arith.index_cast %106 : i32 to index
    %108 = memref.load %arg3[%107] : memref<162xf32, #tpu.memory_space<smem>>
    %c0_64 = arith.constant 0 : index
    %c1_65 = arith.constant 1 : index
    %c0_66 = arith.constant 0 : index
    %c1_67 = arith.constant 1 : index
    %109 = vector.load %arg2[%c0_64, %c1_65, %c0_66, %c1_67] : memref<1x3x16x16xf32, #tpu.memory_space<vmem>>, vector<1x1x14x14xf32>
    %110 = vector.shape_cast %109 : vector<1x1x14x14xf32> to vector<14x14xf32>
    %111 = vector.broadcast %108 : f32 to vector<14x14xf32>
    %112 = arith.mulf %111, %110 : vector<14x14xf32>
    %113 = arith.addf %103, %112 : vector<14x14xf32>
    %c9_i32_68 = arith.constant 9 : i32
    %114 = arith.addi %0, %c9_i32_68 : i32
    %c0_i32_69 = arith.constant 0 : i32
    %115 = arith.addi %114, %c0_i32_69 : i32
    %c2_i32_70 = arith.constant 2 : i32
    %116 = arith.addi %115, %c2_i32_70 : i32
    %117 = arith.index_cast %116 : i32 to index
    %118 = memref.load %arg3[%117] : memref<162xf32, #tpu.memory_space<smem>>
    %c0_71 = arith.constant 0 : index
    %c1_72 = arith.constant 1 : index
    %c0_73 = arith.constant 0 : index
    %c2_74 = arith.constant 2 : index
    %119 = vector.load %arg2[%c0_71, %c1_72, %c0_73, %c2_74] : memref<1x3x16x16xf32, #tpu.memory_space<vmem>>, vector<1x1x14x14xf32>
    %120 = vector.shape_cast %119 : vector<1x1x14x14xf32> to vector<14x14xf32>
    %121 = vector.broadcast %118 : f32 to vector<14x14xf32>
    %122 = arith.mulf %121, %120 : vector<14x14xf32>
    %123 = arith.addf %113, %122 : vector<14x14xf32>
    %c9_i32_75 = arith.constant 9 : i32
    %124 = arith.addi %0, %c9_i32_75 : i32
    %c3_i32_76 = arith.constant 3 : i32
    %125 = arith.addi %124, %c3_i32_76 : i32
    %c0_i32_77 = arith.constant 0 : i32
    %126 = arith.addi %125, %c0_i32_77 : i32
    %127 = arith.index_cast %126 : i32 to index
    %128 = memref.load %arg3[%127] : memref<162xf32, #tpu.memory_space<smem>>
    %c0_78 = arith.constant 0 : index
    %c1_79 = arith.constant 1 : index
    %c1_80 = arith.constant 1 : index
    %c0_81 = arith.constant 0 : index
    %129 = vector.load %arg2[%c0_78, %c1_79, %c1_80, %c0_81] : memref<1x3x16x16xf32, #tpu.memory_space<vmem>>, vector<1x1x14x14xf32>
    %130 = vector.shape_cast %129 : vector<1x1x14x14xf32> to vector<14x14xf32>
    %131 = vector.broadcast %128 : f32 to vector<14x14xf32>
    %132 = arith.mulf %131, %130 : vector<14x14xf32>
    %133 = arith.addf %123, %132 : vector<14x14xf32>
    %c9_i32_82 = arith.constant 9 : i32
    %134 = arith.addi %0, %c9_i32_82 : i32
    %c3_i32_83 = arith.constant 3 : i32
    %135 = arith.addi %134, %c3_i32_83 : i32
    %c1_i32_84 = arith.constant 1 : i32
    %136 = arith.addi %135, %c1_i32_84 : i32
    %137 = arith.index_cast %136 : i32 to index
    %138 = memref.load %arg3[%137] : memref<162xf32, #tpu.memory_space<smem>>
    %c0_85 = arith.constant 0 : index
    %c1_86 = arith.constant 1 : index
    %c1_87 = arith.constant 1 : index
    %c1_88 = arith.constant 1 : index
    %139 = vector.load %arg2[%c0_85, %c1_86, %c1_87, %c1_88] : memref<1x3x16x16xf32, #tpu.memory_space<vmem>>, vector<1x1x14x14xf32>
    %140 = vector.shape_cast %139 : vector<1x1x14x14xf32> to vector<14x14xf32>
    %141 = vector.broadcast %138 : f32 to vector<14x14xf32>
    %142 = arith.mulf %141, %140 : vector<14x14xf32>
    %143 = arith.addf %133, %142 : vector<14x14xf32>
    %c9_i32_89 = arith.constant 9 : i32
    %144 = arith.addi %0, %c9_i32_89 : i32
    %c3_i32_90 = arith.constant 3 : i32
    %145 = arith.addi %144, %c3_i32_90 : i32
    %c2_i32_91 = arith.constant 2 : i32
    %146 = arith.addi %145, %c2_i32_91 : i32
    %147 = arith.index_cast %146 : i32 to index
    %148 = memref.load %arg3[%147] : memref<162xf32, #tpu.memory_space<smem>>
    %c0_92 = arith.constant 0 : index
    %c1_93 = arith.constant 1 : index
    %c1_94 = arith.constant 1 : index
    %c2_95 = arith.constant 2 : index
    %149 = vector.load %arg2[%c0_92, %c1_93, %c1_94, %c2_95] : memref<1x3x16x16xf32, #tpu.memory_space<vmem>>, vector<1x1x14x14xf32>
    %150 = vector.shape_cast %149 : vector<1x1x14x14xf32> to vector<14x14xf32>
    %151 = vector.broadcast %148 : f32 to vector<14x14xf32>
    %152 = arith.mulf %151, %150 : vector<14x14xf32>
    %153 = arith.addf %143, %152 : vector<14x14xf32>
    %c9_i32_96 = arith.constant 9 : i32
    %154 = arith.addi %0, %c9_i32_96 : i32
    %c6_i32_97 = arith.constant 6 : i32
    %155 = arith.addi %154, %c6_i32_97 : i32
    %c0_i32_98 = arith.constant 0 : i32
    %156 = arith.addi %155, %c0_i32_98 : i32
    %157 = arith.index_cast %156 : i32 to index
    %158 = memref.load %arg3[%157] : memref<162xf32, #tpu.memory_space<smem>>
    %c0_99 = arith.constant 0 : index
    %c1_100 = arith.constant 1 : index
    %c2_101 = arith.constant 2 : index
    %c0_102 = arith.constant 0 : index
    %159 = vector.load %arg2[%c0_99, %c1_100, %c2_101, %c0_102] : memref<1x3x16x16xf32, #tpu.memory_space<vmem>>, vector<1x1x14x14xf32>
    %160 = vector.shape_cast %159 : vector<1x1x14x14xf32> to vector<14x14xf32>
    %161 = vector.broadcast %158 : f32 to vector<14x14xf32>
    %162 = arith.mulf %161, %160 : vector<14x14xf32>
    %163 = arith.addf %153, %162 : vector<14x14xf32>
    %c9_i32_103 = arith.constant 9 : i32
    %164 = arith.addi %0, %c9_i32_103 : i32
    %c6_i32_104 = arith.constant 6 : i32
    %165 = arith.addi %164, %c6_i32_104 : i32
    %c1_i32_105 = arith.constant 1 : i32
    %166 = arith.addi %165, %c1_i32_105 : i32
    %167 = arith.index_cast %166 : i32 to index
    %168 = memref.load %arg3[%167] : memref<162xf32, #tpu.memory_space<smem>>
    %c0_106 = arith.constant 0 : index
    %c1_107 = arith.constant 1 : index
    %c2_108 = arith.constant 2 : index
    %c1_109 = arith.constant 1 : index
    %169 = vector.load %arg2[%c0_106, %c1_107, %c2_108, %c1_109] : memref<1x3x16x16xf32, #tpu.memory_space<vmem>>, vector<1x1x14x14xf32>
    %170 = vector.shape_cast %169 : vector<1x1x14x14xf32> to vector<14x14xf32>
    %171 = vector.broadcast %168 : f32 to vector<14x14xf32>
    %172 = arith.mulf %171, %170 : vector<14x14xf32>
    %173 = arith.addf %163, %172 : vector<14x14xf32>
    %c9_i32_110 = arith.constant 9 : i32
    %174 = arith.addi %0, %c9_i32_110 : i32
    %c6_i32_111 = arith.constant 6 : i32
    %175 = arith.addi %174, %c6_i32_111 : i32
    %c2_i32_112 = arith.constant 2 : i32
    %176 = arith.addi %175, %c2_i32_112 : i32
    %177 = arith.index_cast %176 : i32 to index
    %178 = memref.load %arg3[%177] : memref<162xf32, #tpu.memory_space<smem>>
    %c0_113 = arith.constant 0 : index
    %c1_114 = arith.constant 1 : index
    %c2_115 = arith.constant 2 : index
    %c2_116 = arith.constant 2 : index
    %179 = vector.load %arg2[%c0_113, %c1_114, %c2_115, %c2_116] : memref<1x3x16x16xf32, #tpu.memory_space<vmem>>, vector<1x1x14x14xf32>
    %180 = vector.shape_cast %179 : vector<1x1x14x14xf32> to vector<14x14xf32>
    %181 = vector.broadcast %178 : f32 to vector<14x14xf32>
    %182 = arith.mulf %181, %180 : vector<14x14xf32>
    %183 = arith.addf %173, %182 : vector<14x14xf32>
    %c18_i32 = arith.constant 18 : i32
    %184 = arith.addi %0, %c18_i32 : i32
    %c0_i32_117 = arith.constant 0 : i32
    %185 = arith.addi %184, %c0_i32_117 : i32
    %c0_i32_118 = arith.constant 0 : i32
    %186 = arith.addi %185, %c0_i32_118 : i32
    %187 = arith.index_cast %186 : i32 to index
    %188 = memref.load %arg3[%187] : memref<162xf32, #tpu.memory_space<smem>>
    %c0_119 = arith.constant 0 : index
    %c2_120 = arith.constant 2 : index
    %c0_121 = arith.constant 0 : index
    %c0_122 = arith.constant 0 : index
    %189 = vector.load %arg2[%c0_119, %c2_120, %c0_121, %c0_122] : memref<1x3x16x16xf32, #tpu.memory_space<vmem>>, vector<1x1x14x14xf32>
    %190 = vector.shape_cast %189 : vector<1x1x14x14xf32> to vector<14x14xf32>
    %191 = vector.broadcast %188 : f32 to vector<14x14xf32>
    %192 = arith.mulf %191, %190 : vector<14x14xf32>
    %193 = arith.addf %183, %192 : vector<14x14xf32>
    %c18_i32_123 = arith.constant 18 : i32
    %194 = arith.addi %0, %c18_i32_123 : i32
    %c0_i32_124 = arith.constant 0 : i32
    %195 = arith.addi %194, %c0_i32_124 : i32
    %c1_i32_125 = arith.constant 1 : i32
    %196 = arith.addi %195, %c1_i32_125 : i32
    %197 = arith.index_cast %196 : i32 to index
    %198 = memref.load %arg3[%197] : memref<162xf32, #tpu.memory_space<smem>>
    %c0_126 = arith.constant 0 : index
    %c2_127 = arith.constant 2 : index
    %c0_128 = arith.constant 0 : index
    %c1_129 = arith.constant 1 : index
    %199 = vector.load %arg2[%c0_126, %c2_127, %c0_128, %c1_129] : memref<1x3x16x16xf32, #tpu.memory_space<vmem>>, vector<1x1x14x14xf32>
    %200 = vector.shape_cast %199 : vector<1x1x14x14xf32> to vector<14x14xf32>
    %201 = vector.broadcast %198 : f32 to vector<14x14xf32>
    %202 = arith.mulf %201, %200 : vector<14x14xf32>
    %203 = arith.addf %193, %202 : vector<14x14xf32>
    %c18_i32_130 = arith.constant 18 : i32
    %204 = arith.addi %0, %c18_i32_130 : i32
    %c0_i32_131 = arith.constant 0 : i32
    %205 = arith.addi %204, %c0_i32_131 : i32
    %c2_i32_132 = arith.constant 2 : i32
    %206 = arith.addi %205, %c2_i32_132 : i32
    %207 = arith.index_cast %206 : i32 to index
    %208 = memref.load %arg3[%207] : memref<162xf32, #tpu.memory_space<smem>>
    %c0_133 = arith.constant 0 : index
    %c2_134 = arith.constant 2 : index
    %c0_135 = arith.constant 0 : index
    %c2_136 = arith.constant 2 : index
    %209 = vector.load %arg2[%c0_133, %c2_134, %c0_135, %c2_136] : memref<1x3x16x16xf32, #tpu.memory_space<vmem>>, vector<1x1x14x14xf32>
    %210 = vector.shape_cast %209 : vector<1x1x14x14xf32> to vector<14x14xf32>
    %211 = vector.broadcast %208 : f32 to vector<14x14xf32>
    %212 = arith.mulf %211, %210 : vector<14x14xf32>
    %213 = arith.addf %203, %212 : vector<14x14xf32>
    %c18_i32_137 = arith.constant 18 : i32
    %214 = arith.addi %0, %c18_i32_137 : i32
    %c3_i32_138 = arith.constant 3 : i32
    %215 = arith.addi %214, %c3_i32_138 : i32
    %c0_i32_139 = arith.constant 0 : i32
    %216 = arith.addi %215, %c0_i32_139 : i32
    %217 = arith.index_cast %216 : i32 to index
    %218 = memref.load %arg3[%217] : memref<162xf32, #tpu.memory_space<smem>>
    %c0_140 = arith.constant 0 : index
    %c2_141 = arith.constant 2 : index
    %c1_142 = arith.constant 1 : index
    %c0_143 = arith.constant 0 : index
    %219 = vector.load %arg2[%c0_140, %c2_141, %c1_142, %c0_143] : memref<1x3x16x16xf32, #tpu.memory_space<vmem>>, vector<1x1x14x14xf32>
    %220 = vector.shape_cast %219 : vector<1x1x14x14xf32> to vector<14x14xf32>
    %221 = vector.broadcast %218 : f32 to vector<14x14xf32>
    %222 = arith.mulf %221, %220 : vector<14x14xf32>
    %223 = arith.addf %213, %222 : vector<14x14xf32>
    %c18_i32_144 = arith.constant 18 : i32
    %224 = arith.addi %0, %c18_i32_144 : i32
    %c3_i32_145 = arith.constant 3 : i32
    %225 = arith.addi %224, %c3_i32_145 : i32
    %c1_i32_146 = arith.constant 1 : i32
    %226 = arith.addi %225, %c1_i32_146 : i32
    %227 = arith.index_cast %226 : i32 to index
    %228 = memref.load %arg3[%227] : memref<162xf32, #tpu.memory_space<smem>>
    %c0_147 = arith.constant 0 : index
    %c2_148 = arith.constant 2 : index
    %c1_149 = arith.constant 1 : index
    %c1_150 = arith.constant 1 : index
    %229 = vector.load %arg2[%c0_147, %c2_148, %c1_149, %c1_150] : memref<1x3x16x16xf32, #tpu.memory_space<vmem>>, vector<1x1x14x14xf32>
    %230 = vector.shape_cast %229 : vector<1x1x14x14xf32> to vector<14x14xf32>
    %231 = vector.broadcast %228 : f32 to vector<14x14xf32>
    %232 = arith.mulf %231, %230 : vector<14x14xf32>
    %233 = arith.addf %223, %232 : vector<14x14xf32>
    %c18_i32_151 = arith.constant 18 : i32
    %234 = arith.addi %0, %c18_i32_151 : i32
    %c3_i32_152 = arith.constant 3 : i32
    %235 = arith.addi %234, %c3_i32_152 : i32
    %c2_i32_153 = arith.constant 2 : i32
    %236 = arith.addi %235, %c2_i32_153 : i32
    %237 = arith.index_cast %236 : i32 to index
    %238 = memref.load %arg3[%237] : memref<162xf32, #tpu.memory_space<smem>>
    %c0_154 = arith.constant 0 : index
    %c2_155 = arith.constant 2 : index
    %c1_156 = arith.constant 1 : index
    %c2_157 = arith.constant 2 : index
    %239 = vector.load %arg2[%c0_154, %c2_155, %c1_156, %c2_157] : memref<1x3x16x16xf32, #tpu.memory_space<vmem>>, vector<1x1x14x14xf32>
    %240 = vector.shape_cast %239 : vector<1x1x14x14xf32> to vector<14x14xf32>
    %241 = vector.broadcast %238 : f32 to vector<14x14xf32>
    %242 = arith.mulf %241, %240 : vector<14x14xf32>
    %243 = arith.addf %233, %242 : vector<14x14xf32>
    %c18_i32_158 = arith.constant 18 : i32
    %244 = arith.addi %0, %c18_i32_158 : i32
    %c6_i32_159 = arith.constant 6 : i32
    %245 = arith.addi %244, %c6_i32_159 : i32
    %c0_i32_160 = arith.constant 0 : i32
    %246 = arith.addi %245, %c0_i32_160 : i32
    %247 = arith.index_cast %246 : i32 to index
    %248 = memref.load %arg3[%247] : memref<162xf32, #tpu.memory_space<smem>>
    %c0_161 = arith.constant 0 : index
    %c2_162 = arith.constant 2 : index
    %c2_163 = arith.constant 2 : index
    %c0_164 = arith.constant 0 : index
    %249 = vector.load %arg2[%c0_161, %c2_162, %c2_163, %c0_164] : memref<1x3x16x16xf32, #tpu.memory_space<vmem>>, vector<1x1x14x14xf32>
    %250 = vector.shape_cast %249 : vector<1x1x14x14xf32> to vector<14x14xf32>
    %251 = vector.broadcast %248 : f32 to vector<14x14xf32>
    %252 = arith.mulf %251, %250 : vector<14x14xf32>
    %253 = arith.addf %243, %252 : vector<14x14xf32>
    %c18_i32_165 = arith.constant 18 : i32
    %254 = arith.addi %0, %c18_i32_165 : i32
    %c6_i32_166 = arith.constant 6 : i32
    %255 = arith.addi %254, %c6_i32_166 : i32
    %c1_i32_167 = arith.constant 1 : i32
    %256 = arith.addi %255, %c1_i32_167 : i32
    %257 = arith.index_cast %256 : i32 to index
    %258 = memref.load %arg3[%257] : memref<162xf32, #tpu.memory_space<smem>>
    %c0_168 = arith.constant 0 : index
    %c2_169 = arith.constant 2 : index
    %c2_170 = arith.constant 2 : index
    %c1_171 = arith.constant 1 : index
    %259 = vector.load %arg2[%c0_168, %c2_169, %c2_170, %c1_171] : memref<1x3x16x16xf32, #tpu.memory_space<vmem>>, vector<1x1x14x14xf32>
    %260 = vector.shape_cast %259 : vector<1x1x14x14xf32> to vector<14x14xf32>
    %261 = vector.broadcast %258 : f32 to vector<14x14xf32>
    %262 = arith.mulf %261, %260 : vector<14x14xf32>
    %263 = arith.addf %253, %262 : vector<14x14xf32>
    %c18_i32_172 = arith.constant 18 : i32
    %264 = arith.addi %0, %c18_i32_172 : i32
    %c6_i32_173 = arith.constant 6 : i32
    %265 = arith.addi %264, %c6_i32_173 : i32
    %c2_i32_174 = arith.constant 2 : i32
    %266 = arith.addi %265, %c2_i32_174 : i32
    %267 = arith.index_cast %266 : i32 to index
    %268 = memref.load %arg3[%267] : memref<162xf32, #tpu.memory_space<smem>>
    %c0_175 = arith.constant 0 : index
    %c2_176 = arith.constant 2 : index
    %c2_177 = arith.constant 2 : index
    %c2_178 = arith.constant 2 : index
    %269 = vector.load %arg2[%c0_175, %c2_176, %c2_177, %c2_178] : memref<1x3x16x16xf32, #tpu.memory_space<vmem>>, vector<1x1x14x14xf32>
    %270 = vector.shape_cast %269 : vector<1x1x14x14xf32> to vector<14x14xf32>
    %271 = vector.broadcast %268 : f32 to vector<14x14xf32>
    %272 = arith.mulf %271, %270 : vector<14x14xf32>
    %273 = arith.addf %263, %272 : vector<14x14xf32>
    %c0_179 = arith.constant 0 : index
    %c0_180 = arith.constant 0 : index
    %c0_181 = arith.constant 0 : index
    %c0_182 = arith.constant 0 : index
    %274 = vector.load %arg5[%c0_179, %c0_180, %c0_181, %c0_182] : memref<1x1x14x14xf32, #tpu.memory_space<vmem>>, vector<1x1x14x14xf32>
    %275 = vector.shape_cast %274 : vector<1x1x14x14xf32> to vector<14x14xf32>
    %276 = vector.shape_cast %273 : vector<14x14xf32> to vector<1x1x14x14xf32>
    tpu.vector_store %arg5[%c0_179, %c0_180, %c0_181, %c0_182], %276 {strides = array<i32>} : memref<1x1x14x14xf32, #tpu.memory_space<vmem>>, vector<1x1x14x14xf32>,
    return
  }
  func.func @transform_0(%arg0: i32, %arg1: i32) -> (i32, i32, i32, i32) {
    %c0_i32 = arith.constant 0 : i32
    %c0_i32_0 = arith.constant 0 : i32
    %c0_i32_1 = arith.constant 0 : i32
    %c0_i32_2 = arith.constant 0 : i32
    return %arg0, %c0_i32, %c0_i32_0, %c0_i32_1 : i32, i32, i32, i32
  }
  func.func @transform_1(%arg0: i32, %arg1: i32) -> i32 {
    %c0_i32 = arith.constant 0 : i32
    %c0_i32_0 = arith.constant 0 : i32
    return %c0_i32 : i32
  }
  func.func @transform_2(%arg0: i32, %arg1: i32) -> i32 {
    %c0_i32 = arith.constant 0 : i32
    %c0_i32_0 = arith.constant 0 : i32
    return %c0_i32 : i32
  }
  func.func @transform_3(%arg0: i32, %arg1: i32) -> (i32, i32, i32, i32) {
    %c0_i32 = arith.constant 0 : i32
    %c0_i32_0 = arith.constant 0 : i32
    %c0_i32_1 = arith.constant 0 : i32
    return %arg0, %arg1, %c0_i32, %c0_i32_0 : i32, i32, i32, i32
  }
}

</mosaic_0001>

<llo_original>
// kernel: tpu_custom_call.1
$region0: #{tpu_custom_call.1}
  #allocation0 [shape = 'u32[]', space=smem, size = 0x4, offset = 0x4, fixed_abs, tag = 'smem constant byte address 0x4 - core index']
  #allocation1 [shape = 'u32[144,128]{1,0:T(1,128)}', space=vmem, size = 0x12000, scoped, tag = 'internal scratch']
  %s0 = inlined_call_operand.hbm [shape: f32[2,3,16,16], index: 0, kind: input, shape index: {}]
  %s1 = inlined_call_operand.vmem [shape: f32[162], index: 1, kind: input, shape index: {}]
  %s2 = inlined_call_operand.vmem [shape: f32[6], index: 2, kind: input, shape index: {}]
  %s3 = inlined_call_operand.vmem [shape: f32[2,6,14,14], index: 3, kind: output, shape index: {}]
  %s4 = sld [smem:[#allocation0]]
  $region57: #{tpu_custom_call.1} parent=0
    _
  %s6 = ssub.s32 1, %s4
  %s7 = scalar_select 0, %s6, %s4
  $region1: #{tpu_custom_call.1} parent=0
    #allocation2 [shape = 'u8[49152]{0}', space=vmem, size = 0xc000, scoped, tag = 'input window, operand 0']
    #allocation3 [shape = 's32[2]{0}', space=sflag, size = 0x8, scoped, tag = 'scoped memory for tpu_custom_call.1']
    #allocation4 [shape = 's32[2]{0}', space=sflag, size = 0x8, scoped, tag = 'scoped memory for tpu_custom_call.1']
    #allocation5 [shape = 'u8[1024]{0}', space=smem, size = 0x400, scoped, tag = 'input window, operand 1, single buffered']
    #allocation6 [shape = 'u8[512]{0}', space=smem, size = 0x200, scoped, tag = 'input window, operand 2, single buffered']
    #allocation7 [shape = 's32[1]{0}', space=sflag, size = 0x4, scoped, tag = 'scoped memory for tpu_custom_call.1']
    %8 = vsyncpa [#allocation3], 0
    %s9 = scalar_lea.sflag [#allocation3], 1
    %10 = vsyncpa %s9, 0
    %11 = vsyncpa [#allocation4], 0
    %12 = vsyncpa [#allocation7], 0
    loop: start=0, step=1, limit=14
    $region2: #{tpu_custom_call.1} parent=1 // loop_pre_header
      _
    $region3: #{tpu_custom_call.1} parent=1 // loop_header
      %s14 = sphi 0, %s18
      %p15 = scmp.ge.s32.totalorder %s14, 14
      %s21 = sphi 0, %s33
      %s22 = sphi 0, %s29
      %s23 = sphi 0, %s21
      %s24 = sphi 0, %s22
      %s25 = sphi 0, %s23
      %s26 = sphi 0, %s24
      %s36 = sphi 0, %s38
      %s39 = sphi 0, %s36
      %s40 = sphi 0, %s39
      %s56 = sphi 0, %s40
      %s60 = sphi 0, %s60
      %s62 = sphi 0, %s60
      %s63 = sphi 0, %s62
      %s77 = sphi 0, %s63
      %s81 = sphi 0, %s81
      %s83 = sphi 0, %s81
      %s84 = sphi 0, %s83
      %s98 = sphi 0, %s84
      %s106 = sphi 0, %s108
      %s109 = sphi 0, %s106
      %s110 = sphi 0, %s109
      %s126 = sphi 0, %s110
    $region4: #{tpu_custom_call.1} parent=1 // loop_header_branch
      %17 = sbr.rel (%p15) target = $region8
    $region5: #{tpu_custom_call.1} parent=1 // loop_body
      %s19 = ssub.s32 %s14, 1
      %s20 = ssub.s32 %s14, 2
      %s27 = sadd.s32 1, %s22
      %p28 = scmp.ge.s32.totalorder %s27, 6
      %s29 = scalar_select %p28, 0, %s27
      %s30 = sadd.s32 1, %s21
      %s31 = scalar_select %p28, %s30, %s21
      %p32 = scmp.ge.s32.totalorder %s31, 2
      %s33 = scalar_select %p32, 0, %s31
      %s34 = ssub.s32 %s21, %s33
      %p35 = scmp.eq.s32.totalorder %s34, 0
      %s37 = sadd.s32 %s36, 1
      %s38 = scalar_select %p35, %s36, %s37
      %p41 = pneg %p35
      %p42 = scmp.eq.s32.totalorder %s14, 11
      %p43 = por %p41, %p42
      %p44 = scmp.ne.s32.totalorder %s36, %s39
      %p45 = scmp.eq.s32.totalorder %s14, 0
      %p46 = por %p44, %p45
      %p47 = scmp.ne.s32.totalorder %s36, %s39
      %p48 = scmp.eq.s32.totalorder %s19, 11
      %p49 = por %p47, %p48
      %p50 = scmp.ne.s32.totalorder %s39, %s40
      %p51 = scmp.eq.s32.totalorder %s19, 0
      %p52 = por %p50, %p51
      %p53 = scmp.ne.s32.totalorder %s39, %s40
      %p54 = scmp.eq.s32.totalorder %s20, 11
      %p55 = por %p53, %p54
      %p57 = scmp.ne.s32.totalorder %s40, %s56
      %p58 = scmp.eq.s32.totalorder %s20, 0
      %p59 = por %p57, %p58
      %s61 = sadd.s32 %s60, 1
      %p64 = scmp.eq.s32.totalorder %s14, 11
      %p65 = scmp.ne.s32.totalorder %s60, %s62
      %p66 = scmp.eq.s32.totalorder %s14, 0
      %p67 = por %p65, %p66
      %p68 = scmp.ne.s32.totalorder %s60, %s62
      %p69 = scmp.eq.s32.totalorder %s19, 11
      %p70 = por %p68, %p69
      %p71 = scmp.ne.s32.totalorder %s62, %s63
      %p72 = scmp.eq.s32.totalorder %s19, 0
      %p73 = por %p71, %p72
      %p74 = scmp.ne.s32.totalorder %s62, %s63
      %p75 = scmp.eq.s32.totalorder %s20, 11
      %p76 = por %p74, %p75
      %p78 = scmp.ne.s32.totalorder %s63, %s77
      %p79 = scmp.eq.s32.totalorder %s20, 0
      %p80 = por %p78, %p79
      %s82 = sadd.s32 %s81, 1
      %p85 = scmp.eq.s32.totalorder %s14, 11
      %p86 = scmp.ne.s32.totalorder %s81, %s83
      %p87 = scmp.eq.s32.totalorder %s14, 0
      %p88 = por %p86, %p87
      %p89 = scmp.ne.s32.totalorder %s81, %s83
      %p90 = scmp.eq.s32.totalorder %s19, 11
      %p91 = por %p89, %p90
      %p92 = scmp.ne.s32.totalorder %s83, %s84
      %p93 = scmp.eq.s32.totalorder %s19, 0
      %p94 = por %p92, %p93
      %p95 = scmp.ne.s32.totalorder %s83, %s84
      %p96 = scmp.eq.s32.totalorder %s20, 11
      %p97 = por %p95, %p96
      %p99 = scmp.ne.s32.totalorder %s84, %s98
      %p100 = scmp.eq.s32.totalorder %s20, 0
      %p101 = por %p99, %p100
      %s102 = ssub.s32 %s21, %s33
      %s103 = ssub.s32 %s22, %s29
      %s104 = sor.u32 %s102, %s103
      %p105 = scmp.eq.s32.totalorder %s104, 0
      %s107 = sadd.s32 %s106, 1
      %s108 = scalar_select %p105, %s106, %s107
      %p111 = pneg %p105
      %p112 = scmp.eq.s32.totalorder %s14, 11
      %p113 = por %p111, %p112
      %p114 = scmp.ne.s32.totalorder %s106, %s109
      %p115 = scmp.eq.s32.totalorder %s14, 0
      %p116 = por %p114, %p115
      %p117 = scmp.ne.s32.totalorder %s106, %s109
      %p118 = scmp.eq.s32.totalorder %s19, 11
      %p119 = por %p117, %p118
      %p120 = scmp.ne.s32.totalorder %s109, %s110
      %p121 = scmp.eq.s32.totalorder %s19, 0
      %p122 = por %p120, %p121
      %p123 = scmp.ne.s32.totalorder %s109, %s110
      %p124 = scmp.eq.s32.totalorder %s20, 11
      %p125 = por %p123, %p124
      %p127 = scmp.ne.s32.totalorder %s110, %s126
      %p128 = scmp.eq.s32.totalorder %s20, 0
      %p129 = por %p127, %p128
      %p130 = scmp.le.s32.totalorder 1, %s14
      %p131 = scmp.lt.s32.totalorder %s14, 13
      %p132 = pnand %p130, %p131
      %p133 = pneg %p132
      // Predicated region
      $region9: #{tpu_custom_call.1} parent=5 // pred_check
        _
      $region10: #{tpu_custom_call.1} parent=5 // pred_check_branch
        %135 = sbr.rel (%p132) target = $region12
      $region11: #{tpu_custom_call.1} parent=5 // pred_region
        %s136 = ssub.s32 %s14, 1
        // Predicated region
        $region13: #{tpu_custom_call.1} parent=11 // pred_check
          %p137 = pneg %p73
        $region14: #{tpu_custom_call.1} parent=11 // pred_check_branch
          %139 = sbr.rel (%p137) target = $region16
        $region15: #{tpu_custom_call.1} parent=11 // pred_region
          %s141 = ssub.s32 32, 32
          %142 = vsyncadd [#allocation4], %s141
          %s144 = sshll.u32 %s1, 4
          %s145 = int_to_ptr.vmem [resolvable:$true] %s144
          %147 = dma.vmem_to_smem %s145, 32, [#allocation5], [#allocation4]
        $region16: #{tpu_custom_call.1} parent=11 // pred_fallthru
          _
        // Predicated region
        $region17: #{tpu_custom_call.1} parent=11 // pred_check
          %p148 = pneg %p94
        $region18: #{tpu_custom_call.1} parent=11 // pred_check_branch
          %150 = sbr.rel (%p148) target = $region20
        $region19: #{tpu_custom_call.1} parent=11 // pred_region
          %s152 = ssub.s32 16, 16
          %153 = vsyncadd [#allocation7], %s152
          %s155 = sshll.u32 %s2, 4
          %s156 = int_to_ptr.vmem [resolvable:$true] %s155
          %158 = dma.vmem_to_smem %s156, 16, [#allocation6], [#allocation7]
        $region20: #{tpu_custom_call.1} parent=11 // pred_fallthru
          _
      $region12: #{tpu_custom_call.1} parent=5 // pred_fallthru
        _
      %p159 = scmp.lt.s32.totalorder %s14, 12
      // Predicated region
      $region21: #{tpu_custom_call.1} parent=5 // pred_check
        %p160 = pneg %p159
      $region22: #{tpu_custom_call.1} parent=5 // pred_check_branch
        %162 = sbr.rel (%p160) target = $region24
      $region23: #{tpu_custom_call.1} parent=5 // pred_region
        // Predicated region
        $region25: #{tpu_custom_call.1} parent=23 // pred_check
          %p163 = pneg %p46
        $region26: #{tpu_custom_call.1} parent=23 // pred_check_branch
          %165 = sbr.rel (%p163) target = $region28
        $region27: #{tpu_custom_call.1} parent=23 // pred_region
          %s166 = sand.u32 %s36, 1
          %s167 = scalar_lea.sflag [#allocation3], %s166
          %s168 = sand.u32 %s36, 1
          %s169 = smul.addr %s168, 48
          %s170 = scalar_lea.vmem [#allocation2], %s169
          %s172 = ssub.s32 768, 768
          %173 = vsyncadd %s167, %s172
          %s174 = smul.addr %s21, 6
          %s175 = smul.addr %s174, 128
          %s176 = scalar_lea.hbm %s0, %s175
          %s177 = sshll.u32 %s170, 4
          %s178 = int_to_ptr.vmem [resolvable:$true] %s177
          %183 = dma.hbm_to_vmem [thread:$0]  %s176, 768, %s178, %s167, 128, 128, 8
        $region28: #{tpu_custom_call.1} parent=23 // pred_fallthru
          _
      $region24: #{tpu_custom_call.1} parent=5 // pred_fallthru
        _
      %p184 = scmp.le.s32.totalorder 1, %s14
      %p185 = scmp.lt.s32.totalorder %s14, 13
      %p186 = pnand %p184, %p185
      %p187 = pneg %p186
      // Predicated region
      $region29: #{tpu_custom_call.1} parent=5 // pred_check
        _
      $region30: #{tpu_custom_call.1} parent=5 // pred_check_branch
        %189 = sbr.rel (%p186) target = $region32
      $region31: #{tpu_custom_call.1} parent=5 // pred_region
        %s190 = ssub.s32 %s14, 1
        %s191 = sand.u32 %s39, 1
        %s192 = scalar_lea.sflag [#allocation3], %s191
        %s193 = sand.u32 %s39, 1
        %s194 = smul.addr %s193, 48
        %s195 = scalar_lea.vmem [#allocation2], %s194
        // Predicated region
        $region33: #{tpu_custom_call.1} parent=31 // pred_check
          %p196 = pneg %p52
        $region34: #{tpu_custom_call.1} parent=31 // pred_check_branch
          %198 = sbr.rel (%p196) target = $region36
        $region35: #{tpu_custom_call.1} parent=31 // pred_region
          %199 = dma.done %s192, 768
        $region36: #{tpu_custom_call.1} parent=31 // pred_fallthru
          _
        // Predicated region
        $region37: #{tpu_custom_call.1} parent=31 // pred_check
          %p200 = pneg %p73
        $region38: #{tpu_custom_call.1} parent=31 // pred_check_branch
          %202 = sbr.rel (%p200) target = $region40
        $region39: #{tpu_custom_call.1} parent=31 // pred_region
          %203 = dma.done [#allocation4], 32
        $region40: #{tpu_custom_call.1} parent=31 // pred_fallthru
          _
        // Predicated region
        $region41: #{tpu_custom_call.1} parent=31 // pred_check
          %p204 = pneg %p94
        $region42: #{tpu_custom_call.1} parent=31 // pred_check_branch
          %206 = sbr.rel (%p204) target = $region44
        $region43: #{tpu_custom_call.1} parent=31 // pred_region
          %207 = dma.done [#allocation7], 16
        $region44: #{tpu_custom_call.1} parent=31 // pred_fallthru
          _
        %208 = sfence
        %s209 = sand.u32 %s39, 1
        %s210 = scalar_lea.sflag [#allocation3], %s209
        %s211 = sand.u32 %s39, 1
        %s212 = smul.addr %s211, 48
        %s213 = scalar_lea.vmem [#allocation2], %s212
        %p214 = pneg %p52
        %p215 = pneg %p49
        %p216 = pneg %p73
        %p217 = pneg %p70
        %p218 = pneg %p94
        %p219 = pneg %p91
        %p220 = pneg %p122
        %p221 = pneg %p119
        %p222 = scmp.lt.s32.totalorder %s23, 1
        %s223 = scalar_select %p222, %s23, 1
        %p224 = scmp.lt.s32.totalorder %s24, 5
        %s225 = scalar_select %p224, %s24, 5
        %s226 = smul.addr %s225, 2
        %s227 = smul.addr %s223, 12
        %s228 = sadd.s32 %s226, %s227
        %s229 = smul.addr %s228, 8
        %s230 = scalar_lea.vmem %s3, %s229
        %p231 = scmp.lt.s32.totalorder %s23, 1
        %s232 = scalar_select %p231, %s23, 1
        %p233 = scmp.lt.s32.totalorder %s24, 5
        %s234 = scalar_select %p233, %s24, 5
        %s235 = smul.addr %s234, 2
        %s236 = smul.addr %s232, 12
        %s237 = sadd.s32 %s235, %s236
        %s238 = smul.addr %s237, 8
        %s239 = scalar_lea.vmem %s3, %s238
        %s240 = smul.u32 %s24, 27
        %s241 = sld [smem:[#allocation6 + %s24]]
        %v242 = vstv %s241
        %s243 = sld [smem:[#allocation5 + %s240]]
        %v244 = vld [vmem:[%s195] sm:$0xff]
        %v245 = vld [vmem:[%s195 + $0x8] sm:$0x3f]
        %v246 = vstv %s243
        %v247 = vmul.f32 %v246, %v244
        %v248 = vmul.f32 %v246, %v245
        %v249 = vadd.f32 %v242, %v247
        %v250 = vadd.f32 %v242, %v248
        %s251 = sadd.s32 %s240, 1
        %s252 = sld [smem:[#allocation5 + %s251]]
        %v253 = vstv %s252
        %v254 = vmul.f32 %v253, %v244
        %v255 = vmul.f32 %v253, %v245
        %258 = vrot.lane.b32.xlu0 %v254, 127
        %v259 = vpop.permute.xlu0 %258
        %260 = vrot.lane.b32.xlu0 %v255, 127
        %v261 = vpop.permute.xlu0 %260
        %v264 = vadd.f32 %v249, %v259
        %v265 = vadd.f32 %v250, %v261
        %s266 = sadd.s32 %s240, 2
        %s267 = sld [smem:[#allocation5 + %s266]]
        %v268 = vstv %s267
        %v269 = vmul.f32 %v268, %v244
        %v270 = vmul.f32 %v268, %v245
        %273 = vrot.lane.b32.xlu0 %v269, 126
        %v274 = vpop.permute.xlu0 %273
        %275 = vrot.lane.b32.xlu0 %v270, 126
        %v276 = vpop.permute.xlu0 %275
        %v279 = vadd.f32 %v264, %v274
        %v280 = vadd.f32 %v265, %v276
        %s281 = sadd.s32 %s240, 3
        %s282 = sld [smem:[#allocation5 + %s281]]
        %v283 = vld [vmem:[%s195 + $0x1] sm:$0xff]
        %v284 = vld [vmem:[%s195 + $0x9] sm:$0x3f]
        %v285 = vstv %s282
        %v286 = vmul.f32 %v285, %v283
        %v287 = vmul.f32 %v285, %v284
        %v288 = vadd.f32 %v279, %v286
        %v289 = vadd.f32 %v280, %v287
        %s290 = sadd.s32 %s240, 4
        %s291 = sld [smem:[#allocation5 + %s290]]
        %v292 = vstv %s291
        %v293 = vmul.f32 %v292, %v283
        %v294 = vmul.f32 %v292, %v284
        %297 = vrot.lane.b32.xlu0 %v293, 127
        %v298 = vpop.permute.xlu0 %297
        %299 = vrot.lane.b32.xlu0 %v294, 127
        %v300 = vpop.permute.xlu0 %299
        %v303 = vadd.f32 %v288, %v298
        %v304 = vadd.f32 %v289, %v300
        %s305 = sadd.s32 %s240, 5
        %s306 = sld [smem:[#allocation5 + %s305]]
        %v307 = vstv %s306
        %v308 = vmul.f32 %v307, %v283
        %v309 = vmul.f32 %v307, %v284
        %312 = vrot.lane.b32.xlu0 %v308, 126
        %v313 = vpop.permute.xlu0 %312
        %314 = vrot.lane.b32.xlu0 %v309, 126
        %v315 = vpop.permute.xlu0 %314
        %v318 = vadd.f32 %v303, %v313
        %v319 = vadd.f32 %v304, %v315
        %s320 = sadd.s32 %s240, 6
        %s321 = sld [smem:[#allocation5 + %s320]]
        %v322 = vld [vmem:[%s195 + $0x2] sm:$0xff]
        %v323 = vld [vmem:[%s195 + $0xa] sm:$0x3f]
        %v324 = vstv %s321
        %v325 = vmul.f32 %v324, %v322
        %v326 = vmul.f32 %v324, %v323
        %v327 = vadd.f32 %v318, %v325
        %v328 = vadd.f32 %v319, %v326
        %s329 = sadd.s32 %s240, 7
        %s330 = sld [smem:[#allocation5 + %s329]]
        %v331 = vstv %s330
        %v332 = vmul.f32 %v331, %v322
        %v333 = vmul.f32 %v331, %v323
        %336 = vrot.lane.b32.xlu0 %v332, 127
        %v337 = vpop.permute.xlu0 %336
        %338 = vrot.lane.b32.xlu0 %v333, 127
        %v339 = vpop.permute.xlu0 %338
        %v342 = vadd.f32 %v327, %v337
        %v343 = vadd.f32 %v328, %v339
        %s344 = sadd.s32 %s240, 8
        %s345 = sld [smem:[#allocation5 + %s344]]
        %v346 = vstv %s345
        %v347 = vmul.f32 %v346, %v322
        %v348 = vmul.f32 %v346, %v323
        %351 = vrot.lane.b32.xlu0 %v347, 126
        %v352 = vpop.permute.xlu0 %351
        %353 = vrot.lane.b32.xlu0 %v348, 126
        %v354 = vpop.permute.xlu0 %353
        %v357 = vadd.f32 %v342, %v352
        %v358 = vadd.f32 %v343, %v354
        %s359 = sadd.s32 %s240, 9
        %s360 = sld [smem:[#allocation5 + %s359]]
        %s361 = scalar_lea.vmem %s195, 16 [#allocation2]
        %v362 = vld [vmem:[%s361] sm:$0xff]
        %v363 = vld [vmem:[%s361 + $0x8] sm:$0x3f]
        %v364 = vstv %s360
        %v365 = vmul.f32 %v364, %v362
        %v366 = vmul.f32 %v364, %v363
        %v367 = vadd.f32 %v357, %v365
        %v368 = vadd.f32 %v358, %v366
        %s369 = sadd.s32 %s240, 10
        %s370 = sld [smem:[#allocation5 + %s369]]
        %v371 = vstv %s370
        %v372 = vmul.f32 %v371, %v362
        %v373 = vmul.f32 %v371, %v363
        %376 = vrot.lane.b32.xlu0 %v372, 127
        %v377 = vpop.permute.xlu0 %376
        %378 = vrot.lane.b32.xlu0 %v373, 127
        %v379 = vpop.permute.xlu0 %378
        %v382 = vadd.f32 %v367, %v377
        %v383 = vadd.f32 %v368, %v379
        %s384 = sadd.s32 %s240, 11
        %s385 = sld [smem:[#allocation5 + %s384]]
        %v386 = vstv %s385
        %v387 = vmul.f32 %v386, %v362
        %v388 = vmul.f32 %v386, %v363
        %391 = vrot.lane.b32.xlu0 %v387, 126
        %v392 = vpop.permute.xlu0 %391
        %393 = vrot.lane.b32.xlu0 %v388, 126
        %v394 = vpop.permute.xlu0 %393
        %v397 = vadd.f32 %v382, %v392
        %v398 = vadd.f32 %v383, %v394
        %s399 = sadd.s32 %s240, 12
        %s400 = sld [smem:[#allocation5 + %s399]]
        %v401 = vld [vmem:[%s361 + $0x1] sm:$0xff]
        %v402 = vld [vmem:[%s361 + $0x9] sm:$0x3f]
        %v403 = vstv %s400
        %v404 = vmul.f32 %v403, %v401
        %v405 = vmul.f32 %v403, %v402
        %v406 = vadd.f32 %v397, %v404
        %v407 = vadd.f32 %v398, %v405
        %s408 = sadd.s32 %s240, 13
        %s409 = sld [smem:[#allocation5 + %s408]]
        %v410 = vstv %s409
        %v411 = vmul.f32 %v410, %v401
        %v412 = vmul.f32 %v410, %v402
        %415 = vrot.lane.b32.xlu0 %v411, 127
        %v416 = vpop.permute.xlu0 %415
        %417 = vrot.lane.b32.xlu0 %v412, 127
        %v418 = vpop.permute.xlu0 %417
        %v421 = vadd.f32 %v406, %v416
        %v422 = vadd.f32 %v407, %v418
        %s423 = sadd.s32 %s240, 14
        %s424 = sld [smem:[#allocation5 + %s423]]
        %v425 = vstv %s424
        %v426 = vmul.f32 %v425, %v401
        %v427 = vmul.f32 %v425, %v402
        %430 = vrot.lane.b32.xlu0 %v426, 126
        %v431 = vpop.permute.xlu0 %430
        %432 = vrot.lane.b32.xlu0 %v427, 126
        %v433 = vpop.permute.xlu0 %432
        %v436 = vadd.f32 %v421, %v431
        %v437 = vadd.f32 %v422, %v433
        %s438 = sadd.s32 %s240, 15
        %s439 = sld [smem:[#allocation5 + %s438]]
        %v440 = vld [vmem:[%s361 + $0x2] sm:$0xff]
        %v441 = vld [vmem:[%s361 + $0xa] sm:$0x3f]
        %v442 = vstv %s439
        %v443 = vmul.f32 %v442, %v440
        %v444 = vmul.f32 %v442, %v441
        %v445 = vadd.f32 %v436, %v443
        %v446 = vadd.f32 %v437, %v444
        %s447 = sadd.s32 %s240, 16
        %s448 = sld [smem:[#allocation5 + %s447]]
        %v449 = vstv %s448
        %v450 = vmul.f32 %v449, %v440
        %v451 = vmul.f32 %v449, %v441
        %454 = vrot.lane.b32.xlu0 %v450, 127
        %v455 = vpop.permute.xlu0 %454
        %456 = vrot.lane.b32.xlu0 %v451, 127
        %v457 = vpop.permute.xlu0 %456
        %v460 = vadd.f32 %v445, %v455
        %v461 = vadd.f32 %v446, %v457
        %s462 = sadd.s32 %s240, 17
        %s463 = sld [smem:[#allocation5 + %s462]]
        %v464 = vstv %s463
        %v465 = vmul.f32 %v464, %v440
        %v466 = vmul.f32 %v464, %v441
        %469 = vrot.lane.b32.xlu0 %v465, 126
        %v470 = vpop.permute.xlu0 %469
        %471 = vrot.lane.b32.xlu0 %v466, 126
        %v472 = vpop.permute.xlu0 %471
        %v475 = vadd.f32 %v460, %v470
        %v476 = vadd.f32 %v461, %v472
        %s477 = sadd.s32 %s240, 18
        %s478 = sld [smem:[#allocation5 + %s477]]
        %s479 = scalar_lea.vmem %s195, 32 [#allocation2]
        %v480 = vld [vmem:[%s479] sm:$0xff]
        %v481 = vld [vmem:[%s479 + $0x8] sm:$0x3f]
        %v482 = vstv %s478
        %v483 = vmul.f32 %v482, %v480
        %v484 = vmul.f32 %v482, %v481
        %v485 = vadd.f32 %v475, %v483
        %v486 = vadd.f32 %v476, %v484
        %s487 = sadd.s32 %s240, 19
        %s488 = sld [smem:[#allocation5 + %s487]]
        %v489 = vstv %s488
        %v490 = vmul.f32 %v489, %v480
        %v491 = vmul.f32 %v489, %v481
        %494 = vrot.lane.b32.xlu0 %v490, 127
        %v495 = vpop.permute.xlu0 %494
        %496 = vrot.lane.b32.xlu0 %v491, 127
        %v497 = vpop.permute.xlu0 %496
        %v500 = vadd.f32 %v485, %v495
        %v501 = vadd.f32 %v486, %v497
        %s502 = sadd.s32 %s240, 20
        %s503 = sld [smem:[#allocation5 + %s502]]
        %v504 = vstv %s503
        %v505 = vmul.f32 %v504, %v480
        %v506 = vmul.f32 %v504, %v481
        %509 = vrot.lane.b32.xlu0 %v505, 126
        %v510 = vpop.permute.xlu0 %509
        %511 = vrot.lane.b32.xlu0 %v506, 126
        %v512 = vpop.permute.xlu0 %511
        %v515 = vadd.f32 %v500, %v510
        %v516 = vadd.f32 %v501, %v512
        %s517 = sadd.s32 %s240, 21
        %s518 = sld [smem:[#allocation5 + %s517]]
        %v519 = vld [vmem:[%s479 + $0x1] sm:$0xff]
        %v520 = vld [vmem:[%s479 + $0x9] sm:$0x3f]
        %v521 = vstv %s518
        %v522 = vmul.f32 %v521, %v519
        %v523 = vmul.f32 %v521, %v520
        %v524 = vadd.f32 %v515, %v522
        %v525 = vadd.f32 %v516, %v523
        %s526 = sadd.s32 %s240, 22
        %s527 = sld [smem:[#allocation5 + %s526]]
        %v528 = vstv %s527
        %v529 = vmul.f32 %v528, %v519
        %v530 = vmul.f32 %v528, %v520
        %533 = vrot.lane.b32.xlu0 %v529, 127
        %v534 = vpop.permute.xlu0 %533
        %535 = vrot.lane.b32.xlu0 %v530, 127
        %v536 = vpop.permute.xlu0 %535
        %v539 = vadd.f32 %v524, %v534
        %v540 = vadd.f32 %v525, %v536
        %s541 = sadd.s32 %s240, 23
        %s542 = sld [smem:[#allocation5 + %s541]]
        %v543 = vstv %s542
        %v544 = vmul.f32 %v543, %v519
        %v545 = vmul.f32 %v543, %v520
        %548 = vrot.lane.b32.xlu0 %v544, 126
        %v549 = vpop.permute.xlu0 %548
        %550 = vrot.lane.b32.xlu0 %v545, 126
        %v551 = vpop.permute.xlu0 %550
        %v554 = vadd.f32 %v539, %v549
        %v555 = vadd.f32 %v540, %v551
        %s556 = sadd.s32 %s240, 24
        %s557 = sld [smem:[#allocation5 + %s556]]
        %v558 = vld [vmem:[%s479 + $0x2] sm:$0xff]
        %v559 = vld [vmem:[%s479 + $0xa] sm:$0x3f]
        %v560 = vstv %s557
        %v561 = vmul.f32 %v560, %v558
        %v562 = vmul.f32 %v560, %v559
        %v563 = vadd.f32 %v554, %v561
        %v564 = vadd.f32 %v555, %v562
        %s565 = sadd.s32 %s240, 25
        %s566 = sld [smem:[#allocation5 + %s565]]
        %v567 = vstv %s566
        %v568 = vmul.f32 %v567, %v558
        %v569 = vmul.f32 %v567, %v559
        %572 = vrot.lane.b32.xlu0 %v568, 127
        %v573 = vpop.permute.xlu0 %572
        %574 = vrot.lane.b32.xlu0 %v569, 127
        %v575 = vpop.permute.xlu0 %574
        %v578 = vadd.f32 %v563, %v573
        %v579 = vadd.f32 %v564, %v575
        %s580 = sadd.s32 %s240, 26
        %s581 = sld [smem:[#allocation5 + %s580]]
        %v582 = vstv %s581
        %v583 = vmul.f32 %v582, %v558
        %v584 = vmul.f32 %v582, %v559
        %587 = vrot.lane.b32.xlu0 %v583, 126
        %v588 = vpop.permute.xlu0 %587
        %589 = vrot.lane.b32.xlu0 %v584, 126
        %v590 = vpop.permute.xlu0 %589
        %v593 = vadd.f32 %v578, %v588
        %v594 = vadd.f32 %v579, %v590
        %vm595 = vcmask 113664
        %596 = vst.msk [vmem:[%s239] sm:$0xff] %vm595, %v593
        %vm597 = vcmask 111616
        %598 = vst.msk [vmem:[%s239 + $0x8] sm:$0x3f] %vm597, %v594
        %p599 = scmp.lt.s32.totalorder %s23, 1
        %s600 = scalar_select %p599, %s23, 1
        %p601 = scmp.lt.s32.totalorder %s24, 5
        %s602 = scalar_select %p601, %s24, 5
        %s603 = smul.addr %s602, 2
        %s604 = smul.addr %s600, 12
        %s605 = sadd.s32 %s603, %s604
        %s606 = smul.addr %s605, 8
        %s607 = scalar_lea.vmem %s3, %s606
        // Predicated region
        $region45: #{tpu_custom_call.1} parent=31 // pred_check
          %p608 = pneg %p119
        $region46: #{tpu_custom_call.1} parent=31 // pred_check_branch
          %610 = sbr.rel (%p608) target = $region48
        $region47: #{tpu_custom_call.1} parent=31 // pred_region
          _
        $region48: #{tpu_custom_call.1} parent=31 // pred_fallthru
          _
      $region32: #{tpu_custom_call.1} parent=5 // pred_fallthru
        _
      %p611 = scmp.le.s32.totalorder 2, %s14
      // Predicated region
      $region49: #{tpu_custom_call.1} parent=5 // pred_check
        %p612 = pneg %p611
      $region50: #{tpu_custom_call.1} parent=5 // pred_check_branch
        %614 = sbr.rel (%p612) target = $region52
      $region51: #{tpu_custom_call.1} parent=5 // pred_region
        %s615 = ssub.s32 %s14, 2
        // Predicated region
        $region53: #{tpu_custom_call.1} parent=51 // pred_check
          %p616 = pneg %p125
        $region54: #{tpu_custom_call.1} parent=51 // pred_check_branch
          %618 = sbr.rel (%p616) target = $region56
        $region55: #{tpu_custom_call.1} parent=51 // pred_region
          %p619 = scmp.lt.s32.totalorder %s25, 1
          %s620 = scalar_select %p619, %s25, 1
          %p621 = scmp.lt.s32.totalorder %s26, 5
          %s622 = scalar_select %p621, %s26, 5
          %s623 = smul.addr %s622, 2
          %s624 = smul.addr %s620, 12
          %s625 = sadd.s32 %s623, %s624
          %s626 = smul.addr %s625, 8
          %s627 = scalar_lea.vmem %s3, %s626
        $region56: #{tpu_custom_call.1} parent=51 // pred_fallthru
          _
      $region52: #{tpu_custom_call.1} parent=5 // pred_fallthru
        _
    $region6: #{tpu_custom_call.1} parent=1 // loop_footer
      %s18 = sadd.s32 1, %s14
    $region7: #{tpu_custom_call.1} parent=1 // loop_footer_branch
      %13 = sbr.rel target = $region3
    $region8: #{tpu_custom_call.1} parent=1 // loop_exit
      _
    %628 = vsyncpa [#allocation3], 1
    %s629 = scalar_lea.sflag [#allocation3], 1
    %630 = vsyncpa %s629, 1
    %631 = vsyncpa [#allocation4], 1
    %s632 = scalar_lea.sflag [#allocation4], 1
    %633 = vsyncpa %s632, 1
    %634 = vsyncpa [#allocation7], 1

</llo_original>
